<compile_context>
chip_gen: v7x
topology: tpu7x:2x2x1
jax: 0.10.0
libtpu: 0.0.40
codegen_flags: <defaults>
</compile_context>

<pallas_src>
import functools
import math

import jax
import jax.numpy as jnp
from jax.experimental import pallas as pl
from jax.experimental.pallas import tpu as pltpu


def _cdiv(a, b):
    return -(-a // b)


def _round_up(a, b):
    return _cdiv(a, b) * b


def _mlp_kernel(x_ref, *refs, num_layers, negative_slope, compute_dtype):
    """Fused MLP body. refs = (w1, b1, w2, b2, ..., wL, bL, out_ref)."""
    out_ref = refs[-1]
    h = x_ref[...]                                         # (TB, D_in), compute_dtype
    for layer in range(num_layers):                        # tiny static unroll
        w = refs[2 * layer][...]                           # (D_in_l, D_out_l) compute_dtype
        b = refs[2 * layer + 1][...]                       # (1, D_out_l) f32
        acc = jnp.dot(h, w, preferred_element_type=jnp.float32) + b
        if layer != num_layers - 1:
            # nn.LeakyReLU() default negative_slope = 0.01
            acc = jnp.where(acc >= 0, acc, negative_slope * acc)
            h = acc.astype(compute_dtype)                  # narrow for next MXU pass
        else:
            h = acc                                        # final layer: no activation
        # batch_norm=False -> nn.Identity()
    out_ref[...] = h.astype(out_ref.dtype)


def _mlpnet_ref(x, params, negative_slope=0.01):
    """Pure-JAX f32 reference mirroring the PyTorch forward (default config)."""
    h = jnp.asarray(x, jnp.float32)
    for i, (w, b) in enumerate(params):
        h = h @ jnp.asarray(w, jnp.float32) + jnp.asarray(b, jnp.float32)
        if i != len(params) - 1:
            h = jnp.where(h >= 0, h, negative_slope * h)
    return h


def _mlpnet_ref_quantized(x, params, negative_slope=0.01, compute_dtype=jnp.bfloat16):
    """Reference that mirrors the kernel's bf16-input / f32-accumulate path."""
    h = jnp.asarray(x, jnp.float32).astype(compute_dtype)
    n = len(params)
    for i, (w, b) in enumerate(params):
        w = jnp.asarray(w, jnp.float32).astype(compute_dtype)
        b = jnp.asarray(b, jnp.float32)
        acc = jnp.dot(h, w, preferred_element_type=jnp.float32) + b
        if i != n - 1:
            acc = jnp.where(acc >= 0, acc, negative_slope * acc)
            h = acc.astype(compute_dtype)
        else:
            h = acc
    return h


def mlpnet_forward(x, params, *, negative_slope=0.01, block_b=None,
                   compute_dtype=jnp.bfloat16, use_pallas=None):
    """Pallas forward for MLPNet.

    x      : (B, input_dim) float32.
    params : list of (W, b) per Linear layer, W: (d_in, d_out), b: (d_out,).
             LeakyReLU(0.01) is applied between all but the last layer.
    """
    x = jnp.asarray(x, jnp.float32)
    if x.ndim != 2:
        raise ValueError("expected (batch, input_dim) input")
    B, d_in0 = x.shape
    num_layers = len(params)
    dims = [d_in0] + [int(w.shape[1]) for w, _ in params]
    d_out = dims[-1]

    matmul_flops = 2 * B * sum(a * c for a, c in zip(dims[:-1], dims[1:]))
    if use_pallas is None:
        # Tiny problems: pallas_call fixed overhead >> math; plain XLA fusion wins.
        use_pallas = matmul_flops >= (1 << 20)
    if not use_pallas:
        return _mlpnet_ref(x, params, negative_slope)

    compute_dtype = jnp.dtype(compute_dtype)
    itemsize = compute_dtype.itemsize
    granule = 8 * max(1, 4 // itemsize)          # 8 sublanes (f32) / 16 (bf16 packing)

    # ---- batch-tile sizing from a VMEM budget (portable across v5e/v6e/v7x) ----
    try:
        vmem_cap = int(pltpu.get_tpu_info().vmem_capacity_bytes)
    except Exception:
        vmem_cap = 64 << 20                      # v7x per-TC floor
    budget = min(vmem_cap // 4, 24 << 20)        # conservative working-set budget

    param_bytes = sum(din * dout * itemsize + dout * 4
                      for din, dout in zip(dims[:-1], dims[1:]))
    # Per batch row resident in VMEM: double-buffered x (compute dtype),
    # double-buffered f32 output, f32 intermediates for every layer.
    row_bytes = 2 * itemsize * d_in0 + 2 * 4 * d_out + 4 * sum(dims)
    avail = max(budget - 2 * param_bytes, granule * row_bytes)
    tb_cap = max(granule, (avail // row_bytes) // granule * granule)
    tb_cap = min(tb_cap, 4096)                   # few fat steps; amortizes step cost

    if block_b is None:
        # >=2 grid steps when B permits (lets v7x shard the parallel batch axis
        # across its 2 TensorCores); otherwise one fat tile.
        block_b = max(granule, _cdiv(B, 2))
    tb = max(granule, min(tb_cap, _round_up(block_b, granule)))

    b_pad = _round_up(B, tb)
    x_c = x.astype(compute_dtype)
    if b_pad != B:
        x_c = jnp.pad(x_c, ((0, b_pad - B), (0, 0)))
    grid = (b_pad // tb,)

    # ---- inputs + BlockSpecs ----
    flat_inputs = [x_c]
    in_specs = [pl.BlockSpec((tb, d_in0), lambda i: (i, 0))]
    # Single-buffer the VMEM-resident weights once they reach MiB scale
    # (reclaims headroom on v7x's 64 MiB VMEM); irrelevant for tiny params.
    weight_kwargs = {"pipeline_mode": pl.Buffered(1)} if param_bytes > (1 << 20) else {}
    for (w, b), din, dout in zip(params, dims[:-1], dims[1:]):
        w = jnp.asarray(w, jnp.float32).reshape(din, dout).astype(compute_dtype)
        b = jnp.asarray(b, jnp.float32).reshape(1, dout)
        flat_inputs += [w, b]
        # Constant index_map -> blocks stay resident in VMEM across all grid steps.
        in_specs += [pl.BlockSpec((din, dout), lambda i: (0, 0), **weight_kwargs),
                     pl.BlockSpec((1, dout), lambda i: (0, 0), **weight_kwargs)]

    # ---- scheduler hint (params counted once: they are VMEM-resident) ----
    cost = pl.CostEstimate(
        flops=2 * b_pad * sum(a * c for a, c in zip(dims[:-1], dims[1:]))
              + b_pad * sum(dims[1:]),
        transcendentals=0,
        bytes_accessed=itemsize * b_pad * d_in0 + 4 * b_pad * d_out + param_bytes)

    # ---- explicit scoped-VMEM limit (v5e default is only 16 MiB) ----
    est_vmem = (2 * param_bytes
                + 2 * tb * (itemsize * d_in0 + 4 * d_out)
                + 4 * tb * sum(dims[1:]))
    vmem_limit = int(min(max(2 * est_vmem + (4 << 20), 16 << 20), 48 << 20))

    kernel = functools.partial(_mlp_kernel, num_layers=num_layers,
                               negative_slope=negative_slope,
                               compute_dtype=compute_dtype)

    out = pl.pallas_call(
        kernel,
        out_shape=jax.ShapeDtypeStruct((b_pad, d_out), jnp.float32),
        grid_spec=pltpu.PrefetchScalarGridSpec(
            num_scalar_prefetch=0,
            grid=grid,
            in_specs=in_specs,
            out_specs=pl.BlockSpec((tb, d_out), lambda i: (i, 0)),
        ),
        compiler_params=pltpu.CompilerParams(
            dimension_semantics=("parallel",),
            vmem_limit_bytes=vmem_limit),
        cost_estimate=cost,
    )(*flat_inputs)

    return out[:B]


def _init_mlpnet_params(key, input_dim, output_dim, num_layers=2,
                        embedding_dims=None):
    """Mirror MLPNet.__init__ / _init_parameters (orthogonal weights)."""
    if embedding_dims is None:
        embedding_dims = [input_dim * 2] * (num_layers - 1)
    assert len(embedding_dims) == num_layers - 1
    dims = [input_dim] + list(embedding_dims) + [output_dim]
    ortho = jax.nn.initializers.orthogonal()
    params = []
    for din, dout in zip(dims[:-1], dims[1:]):
        key, k_w, k_b = jax.random.split(key, 3)
        w = ortho(k_w, (din, dout), jnp.float32)          # nn.init.orthogonal_
        bound = 1.0 / math.sqrt(din)                      # torch Linear bias init
        b = jax.random.uniform(k_b, (dout,), jnp.float32, -bound, bound)
        params.append((w, b))
    return params


if __name__ == "__main__":
    key = jax.random.PRNGKey(0)
    input_dim, output_dim = 16, 8                  # default hidden = 2*input_dim = 32
    k_x1, k_x2, k_p = jax.random.split(key, 3)
    params = _init_mlpnet_params(k_p, input_dim, output_dim, num_layers=2)

    # 1) Default tiny batch: force the Pallas path so the kernel itself is exercised.
    batch = 10
    x = jax.random.normal(k_x1, (batch, input_dim), dtype=jnp.float32)
    out = jax.block_until_ready(mlpnet_forward(x, params, use_pallas=True))
    assert out.shape == (batch, output_dim)
    ref_q = _mlpnet_ref_quantized(x, params)
    ref_f = _mlpnet_ref(x, params)
    assert jnp.allclose(out, ref_q, atol=2e-3, rtol=2e-3), "mismatch vs bf16 reference"
    assert jnp.allclose(out, ref_f, atol=5e-2, rtol=5e-2), "mismatch vs f32 reference"

    # 2) Larger batch: auto path picks Pallas with >=2 parallel grid steps and padding.
    batch2 = 1000
    x2 = jax.random.normal(k_x2, (batch2, input_dim), dtype=jnp.float32)
    out2 = jax.block_until_ready(mlpnet_forward(x2, params))
    assert out2.shape == (batch2, output_dim)
    ref_q2 = _mlpnet_ref_quantized(x2, params)
    ref_f2 = _mlpnet_ref(x2, params)
    assert jnp.allclose(out2, ref_q2, atol=2e-3, rtol=2e-3), "mismatch vs bf16 reference (B=1000)"
    assert jnp.allclose(out2, ref_f2, atol=5e-2, rtol=5e-2), "mismatch vs f32 reference (B=1000)"

    print("KERNEL_OK")
</pallas_src>

<mosaic_0001>
module attributes {stable_mosaic.version = 11 : i64} {
  func.func @_mlp_kernel(%arg0: i32, %arg1: memref<16x16xbf16, #tpu.memory_space<vmem>>, %arg2: memref<16x32xbf16, #tpu.memory_space<vmem>>, %arg3: memref<1x32xf32, #tpu.memory_space<vmem>>, %arg4: memref<32x8xbf16, #tpu.memory_space<vmem>>, %arg5: memref<1x8xf32, #tpu.memory_space<vmem>>, %arg6: memref<16x8xf32, #tpu.memory_space<vmem>>) attributes {dimension_semantics = [#tpu.dimension_semantics<parallel>], iteration_bounds = array<i64: 1>, scalar_prefetch = 0 : i64, scratch_operands = 0 : i64, tpu.core_type = #tpu.core_type<tc>, window_params = [{transform_indices = @transform_0, window_bounds = array<i64: 16, 16>}, {pipeline_mode = #tpu.pipeline_mode<synchronous>, transform_indices = @transform_1, window_bounds = array<i64: 16, 32>}, {pipeline_mode = #tpu.pipeline_mode<synchronous>, transform_indices = @transform_2, window_bounds = array<i64: 1, 32>}, {pipeline_mode = #tpu.pipeline_mode<synchronous>, transform_indices = @transform_3, window_bounds = array<i64: 32, 8>}, {pipeline_mode = #tpu.pipeline_mode<synchronous>, transform_indices = @transform_4, window_bounds = array<i64: 1, 8>}, {transform_indices = @transform_5, window_bounds = array<i64: 16, 8>}]} {
    %c0 = arith.constant 0 : index
    %c0_0 = arith.constant 0 : index
    %0 = vector.load %arg1[%c0, %c0_0] : memref<16x16xbf16, #tpu.memory_space<vmem>>, vector<16x16xbf16>
    %c0_1 = arith.constant 0 : index
    %c0_2 = arith.constant 0 : index
    %1 = vector.load %arg2[%c0_1, %c0_2] : memref<16x32xbf16, #tpu.memory_space<vmem>>, vector<16x32xbf16>
    %c0_3 = arith.constant 0 : index
    %c0_4 = arith.constant 0 : index
    %2 = vector.load %arg3[%c0_3, %c0_4] : memref<1x32xf32, #tpu.memory_space<vmem>>, vector<1x32xf32>
    %cst = arith.constant dense<0.000000e+00> : vector<16x32xf32>
    %3 = tpu.matmul %0, %1, %cst {dimension_numbers = #tpu.dot_dimension_numbers<[1], [0], [0], [1], [0, 0, 1, 1], [], []>} : vector<16x16xbf16>, vector<16x32xbf16>, vector<16x32xf32> -> vector<16x32xf32>
    %4 = vector.broadcast %2 : vector<1x32xf32> to vector<16x32xf32>
    %5 = arith.addf %3, %4 : vector<16x32xf32>
    %cst_5 = arith.constant 0.000000e+00 : f32
    %6 = vector.broadcast %cst_5 : f32 to vector<16x32xf32>
    %7 = arith.cmpf oge, %5, %6 : vector<16x32xf32>
    %cst_6 = arith.constant 0.00999999977 : f32
    %8 = vector.broadcast %cst_6 : f32 to vector<16x32xf32>
    %9 = arith.mulf %8, %5 : vector<16x32xf32>
    %10 = arith.select %7, %5, %9 : vector<16x32xi1>, vector<16x32xf32>
    %11 = arith.truncf %10 : vector<16x32xf32> to vector<16x32xbf16>
    %c0_7 = arith.constant 0 : index
    %c0_8 = arith.constant 0 : index
    %12 = vector.load %arg4[%c0_7, %c0_8] : memref<32x8xbf16, #tpu.memory_space<vmem>>, vector<32x8xbf16>
    %c0_9 = arith.constant 0 : index
    %c0_10 = arith.constant 0 : index
    %13 = vector.load %arg5[%c0_9, %c0_10] : memref<1x8xf32, #tpu.memory_space<vmem>>, vector<1x8xf32>
    %cst_11 = arith.constant dense<0.000000e+00> : vector<16x8xf32>
    %14 = tpu.matmul %11, %12, %cst_11 {dimension_numbers = #tpu.dot_dimension_numbers<[1], [0], [0], [1], [0, 0, 1, 1], [], []>} : vector<16x32xbf16>, vector<32x8xbf16>, vector<16x8xf32> -> vector<16x8xf32>
    %15 = vector.broadcast %13 : vector<1x8xf32> to vector<16x8xf32>
    %16 = arith.addf %14, %15 : vector<16x8xf32>
    %c0_12 = arith.constant 0 : index
    %c0_13 = arith.constant 0 : index
    %17 = vector.load %arg6[%c0_12, %c0_13] : memref<16x8xf32, #tpu.memory_space<vmem>>, vector<16x8xf32>
    tpu.vector_store %arg6[%c0_12, %c0_13], %16 {strides = array<i32>} : memref<16x8xf32, #tpu.memory_space<vmem>>, vector<16x8xf32>,
    return
  }
  func.func @transform_0(%arg0: i32) -> (i32, i32) {
    %c0_i32 = arith.constant 0 : i32
    %c0_i32_0 = arith.constant 0 : i32
    return %arg0, %c0_i32 : i32, i32
  }
  func.func @transform_1(%arg0: i32) -> (i32, i32) {
    %c0_i32 = arith.constant 0 : i32
    %c0_i32_0 = arith.constant 0 : i32
    %c0_i32_1 = arith.constant 0 : i32
    return %c0_i32, %c0_i32_0 : i32, i32
  }
  func.func @transform_2(%arg0: i32) -> (i32, i32) {
    %c0_i32 = arith.constant 0 : i32
    %c0_i32_0 = arith.constant 0 : i32
    %c0_i32_1 = arith.constant 0 : i32
    return %c0_i32, %c0_i32_0 : i32, i32
  }
  func.func @transform_3(%arg0: i32) -> (i32, i32) {
    %c0_i32 = arith.constant 0 : i32
    %c0_i32_0 = arith.constant 0 : i32
    %c0_i32_1 = arith.constant 0 : i32
    return %c0_i32, %c0_i32_0 : i32, i32
  }
  func.func @transform_4(%arg0: i32) -> (i32, i32) {
    %c0_i32 = arith.constant 0 : i32
    %c0_i32_0 = arith.constant 0 : i32
    %c0_i32_1 = arith.constant 0 : i32
    return %c0_i32, %c0_i32_0 : i32, i32
  }
  func.func @transform_5(%arg0: i32) -> (i32, i32) {
    %c0_i32 = arith.constant 0 : i32
    %c0_i32_0 = arith.constant 0 : i32
    return %arg0, %c0_i32 : i32, i32
  }
}

</mosaic_0001>

<llo_original>
// kernel: tpu_custom_call.1
$region0: #{tpu_custom_call.1}
  #allocation0 [shape = 'u32[]', space=smem, size = 0x4, offset = 0x4, fixed_abs, tag = 'smem constant byte address 0x4 - core index']
  #allocation1 [shape = 'u32[144,128]{1,0:T(1,128)}', space=vmem, size = 0x12000, scoped, tag = 'internal scratch']
  %s0 = inlined_call_operand.vmem [shape: bf16[16,16], index: 0, kind: input, shape index: {}]
  %s1 = inlined_call_operand.vmem [shape: bf16[16,32], index: 1, kind: input, shape index: {}]
  %s2 = inlined_call_operand.vmem [shape: f32[1,32], index: 2, kind: input, shape index: {}]
  %s3 = inlined_call_operand.vmem [shape: bf16[32,8], index: 3, kind: input, shape index: {}]
  %s4 = inlined_call_operand.vmem [shape: f32[1,8], index: 4, kind: input, shape index: {}]
  %s5 = inlined_call_operand.vmem [shape: f32[16,8], index: 5, kind: output, shape index: {}]
  %s6 = sld [smem:[#allocation0]]
  $region30: #{tpu_custom_call.1} parent=0
    _
  %s8 = ssub.s32 1, %s6
  %s9 = scalar_select 0, %s8, %s6
  // Predicated region
  $region2: #{tpu_custom_call.1} parent=0 // pred_check
    _
  $region3: #{tpu_custom_call.1} parent=0 // pred_check_branch
    %11 = sbr.rel (0) target = $region5
  $region4: #{tpu_custom_call.1} parent=0 // pred_region
    _
  $region5: #{tpu_custom_call.1} parent=0 // pred_fallthru
    _
  // Predicated region
  $region6: #{tpu_custom_call.1} parent=0 // pred_check
    _
  $region7: #{tpu_custom_call.1} parent=0 // pred_check_branch
    %13 = sbr.rel (0) target = $region9
  $region8: #{tpu_custom_call.1} parent=0 // pred_region
    _
  $region9: #{tpu_custom_call.1} parent=0 // pred_fallthru
    _
  // Predicated region
  $region10: #{tpu_custom_call.1} parent=0 // pred_check
    _
  $region11: #{tpu_custom_call.1} parent=0 // pred_check_branch
    %15 = sbr.rel (0) target = $region13
  $region12: #{tpu_custom_call.1} parent=0 // pred_region
    _
  $region13: #{tpu_custom_call.1} parent=0 // pred_fallthru
    _
  // Predicated region
  $region14: #{tpu_custom_call.1} parent=0 // pred_check
    _
  $region15: #{tpu_custom_call.1} parent=0 // pred_check_branch
    %17 = sbr.rel (0) target = $region17
  $region16: #{tpu_custom_call.1} parent=0 // pred_region
    _
  $region17: #{tpu_custom_call.1} parent=0 // pred_fallthru
    _
  // Predicated region
  $region18: #{tpu_custom_call.1} parent=0 // pred_check
    _
  $region19: #{tpu_custom_call.1} parent=0 // pred_check_branch
    %19 = sbr.rel (0) target = $region21
  $region20: #{tpu_custom_call.1} parent=0 // pred_region
    _
  $region21: #{tpu_custom_call.1} parent=0 // pred_fallthru
    _
  %v21 = vld [vmem:[%s0] sm:$0xf]
  %v22 = vld [vmem:[%s0 + $0x4] sm:$0xf]
  %v23 = vld [vmem:[%s1] sm:$0xf]
  %v24 = vld [vmem:[%s1 + $0x4] sm:$0xf]
  %v25 = vld [vmem:[%s2] sm:$0x1]
  %v27 = vlaneseq
  %v28 = vshrl.u32 %v27, 7
  %v29 = vsub.s32 0, %v28
  %v30 = vrot.slane %v25, %v29
  %v34 = vunpack.c.l.b16 %v21
  %v35 = vunpack.c.l.b16 %v22
  %v36 = vpack.c.b16 %v35, %v34
  %v39 = vunpack.c.l.b16 %v23
  %v40 = vunpack.c.l.b16 %v24
  %v41 = vpack.c.b16 %v40, %v39
  %vm43 = vcmask 130048
  %v45 = vsel %vm43, %v36, 0
  %47 = vmatprep.subr.bf16.mxu0 0
  %48 = vmatpush1.bf16.msra.mxu0 %v41
  %49 = vmatprep.subr.bf16.mxu0 0
  %50 = vmatpush1.bf16.msra.mxu0 0
  %51 = vmatprep.subr.bf16.mxu0 0
  %52 = vmatpush1.bf16.msra.mxu0 0
  %53 = vmatprep.subr.bf16.mxu0 0
  %54 = vmatpush1.bf16.msra.mxu0 0
  %55 = vmatprep.subr.bf16.mxu0 0
  %56 = vmatpush1.bf16.msra.mxu0 0
  %57 = vmatprep.subr.bf16.mxu0 0
  %58 = vmatpush1.bf16.msra.mxu0 0
  %59 = vmatprep.subr.bf16.mxu0 0
  %60 = vmatpush1.bf16.msra.mxu0 0
  %61 = vmatprep.subr.bf16.mxu0 0
  %62 = vmatpush1.bf16.msra.mxu0 0
  %63 = vmatprep.subr.bf16.mxu0 0
  %64 = vmatpush1.bf16.msra.mxu0 0
  %65 = vmatprep.subr.bf16.mxu0 0
  %66 = vmatpush1.bf16.msra.mxu0 0
  %67 = vmatprep.subr.bf16.mxu0 0
  %68 = vmatpush1.bf16.msra.mxu0 0
  %69 = vmatprep.subr.bf16.mxu0 0
  %70 = vmatpush1.bf16.msra.mxu0 0
  %71 = vmatprep.subr.bf16.mxu0 0
  %72 = vmatpush1.bf16.msra.mxu0 0
  %73 = vmatprep.subr.bf16.mxu0 0
  %74 = vmatpush1.bf16.msra.mxu0 0
  %75 = vmatprep.subr.bf16.mxu0 0
  %76 = vmatpush1.bf16.msra.mxu0 0
  %77 = vmatprep.subr.bf16.mxu0 0
  %78 = vmatpush1.bf16.msra.mxu0 0
  %79 = vmatprep.mubr.bf16.mxu0 0
  %80 = vmatmul.mubr.bf16.gmra.mrb[0].mxu0 %v45
  %v81 = vpop.f32.mrb[0].mxu0
  %v82 = vadd.f32 %v30, %v81
  %v83 = vpop.f32.mrb[0].mxu0
  %v84 = vpop.f32.mrb[0].mxu0
  %v85 = vadd.f32 %v30, %v84
  %v86 = vpop.f32.mrb[0].mxu0
  %87 = vdwg.mxu0
  %vm88 = vcmp.ge.f32.partialorder %v82, 0.0
  %vm89 = vcmp.ge.f32.partialorder %v85, 0.0
  %v90 = vmul.f32 %v82, 0.01
  %v91 = vmul.f32 %v85, 0.01
  %v92 = vsel %vm88, %v82, %v90
  %v93 = vsel %vm89, %v85, %v91
  %v94 = vpack.c.bf16 %v93, %v92
  %v95 = vld [vmem:[%s3] sm:$0xf]
  %v96 = vld [vmem:[%s3 + $0x4] sm:$0xf]
  %v97 = vld [vmem:[%s3 + $0x8] sm:$0xf]
  %v98 = vld [vmem:[%s3 + $0xc] sm:$0xf]
  %v99 = vld [vmem:[%s4] sm:$0x1]
  %v101 = vlaneseq
  %v102 = vshrl.u32 %v101, 7
  %v103 = vsub.s32 0, %v102
  %v104 = vrot.slane %v99, %v103
  %v110 = vunpack.c.l.b16 %v95
  %v111 = vunpack.c.l.b16 %v96
  %v112 = vunpack.c.l.b16 %v97
  %v113 = vunpack.c.l.b16 %v98
  %v114 = vpack.c.b16 %v111, %v110
  %v115 = vpack.c.b16 %v113, %v112
  %vm118 = vcmask 261120
  %v120 = vsel %vm118, %v94, 0
  %122 = vmatprep.subr.bf16.mxu0 0
  %123 = vmatpush1.bf16.msra.mxu0 %v114
  %124 = vmatprep.subr.bf16.mxu0 0
  %125 = vmatpush1.bf16.msra.mxu0 %v115
  %126 = vmatprep.subr.bf16.mxu0 0
  %127 = vmatpush1.bf16.msra.mxu0 0
  %128 = vmatprep.subr.bf16.mxu0 0
  %129 = vmatpush1.bf16.msra.mxu0 0
  %130 = vmatprep.subr.bf16.mxu0 0
  %131 = vmatpush1.bf16.msra.mxu0 0
  %132 = vmatprep.subr.bf16.mxu0 0
  %133 = vmatpush1.bf16.msra.mxu0 0
  %134 = vmatprep.subr.bf16.mxu0 0
  %135 = vmatpush1.bf16.msra.mxu0 0
  %136 = vmatprep.subr.bf16.mxu0 0
  %137 = vmatpush1.bf16.msra.mxu0 0
  %138 = vmatprep.subr.bf16.mxu0 0
  %139 = vmatpush1.bf16.msra.mxu0 0
  %140 = vmatprep.subr.bf16.mxu0 0
  %141 = vmatpush1.bf16.msra.mxu0 0
  %142 = vmatprep.subr.bf16.mxu0 0
  %143 = vmatpush1.bf16.msra.mxu0 0
  %144 = vmatprep.subr.bf16.mxu0 0
  %145 = vmatpush1.bf16.msra.mxu0 0
  %146 = vmatprep.subr.bf16.mxu0 0
  %147 = vmatpush1.bf16.msra.mxu0 0
  %148 = vmatprep.subr.bf16.mxu0 0
  %149 = vmatpush1.bf16.msra.mxu0 0
  %150 = vmatprep.subr.bf16.mxu0 0
  %151 = vmatpush1.bf16.msra.mxu0 0
  %152 = vmatprep.subr.bf16.mxu0 0
  %153 = vmatpush1.bf16.msra.mxu0 0
  %154 = vmatprep.mubr.bf16.mxu0 0
  %155 = vmatmul.mubr.bf16.gmra.mrb[0].mxu0 %v120
  %v156 = vpop.f32.mrb[0].mxu0
  %v157 = vadd.f32 %v104, %v156
  %v158 = vpop.f32.mrb[0].mxu0
  %v159 = vpop.f32.mrb[0].mxu0
  %v160 = vadd.f32 %v104, %v159
  %v161 = vpop.f32.mrb[0].mxu0
  %162 = vdwg.mxu0
  %vm163 = vcmask 64512
  %164 = vst.msk [vmem:[%s5] sm:$0xff] %vm163, %v157
  %165 = vst.msk [vmem:[%s5 + $0x8] sm:$0xff] %vm163, %v160
  // Predicated region
  $region22: #{tpu_custom_call.1} parent=0 // pred_check
    _
  $region23: #{tpu_custom_call.1} parent=0 // pred_check_branch
    %167 = sbr.rel (0) target = $region25
  $region24: #{tpu_custom_call.1} parent=0 // pred_region
    _
  $region25: #{tpu_custom_call.1} parent=0 // pred_fallthru
    _
  // Predicated region
  $region26: #{tpu_custom_call.1} parent=0 // pred_check
    _
  $region27: #{tpu_custom_call.1} parent=0 // pred_check_branch
    %169 = sbr.rel (0) target = $region29
  $region28: #{tpu_custom_call.1} parent=0 // pred_region
    _
  $region29: #{tpu_custom_call.1} parent=0 // pred_fallthru
    _

</llo_original>
